<compile_context>
chip_gen: v7x
topology: tpu7x:2x2x1
jax: 0.10.0
libtpu: 0.0.40
codegen_flags: <defaults>
</compile_context>

<pallas_src>
import functools

import jax
import jax.numpy as jnp
from jax.experimental import pallas as pl
from jax.experimental.pallas import tpu as pltpu

LN_EPS = 1e-5       # torch.nn.LayerNorm default
_LANE = 128
_SUBLANE = 8


def _round_up(n, m):
    return ((n + m - 1) // m) * m


def _feature_enhancement_kernel(x_ref, w1_ref, b1_ref, g_ref, beta_ref,
                                w2_ref, b2_ref, o_ref, *, h_real):
    x = x_ref[...]                                  # (TM, F), I/O dtype
    x_f32 = x.astype(jnp.float32)

    # ---- Linear 1 on the MXU: operands in W1's dtype (f32 or bf16), f32 accumulate.
    h = jnp.dot(x.astype(w1_ref.dtype), w1_ref[...],
                preferred_element_type=jnp.float32) + b1_ref[...]
    # h: (TM, H_pad). Padded lanes (>= h_real) are exactly zero because the
    # corresponding W1 columns and b1 entries are zero.

    # ---- LayerNorm over the *real* hidden width (f32, VPU/XLU/EUP).
    h_pad = h.shape[-1]
    pad_extra = h_pad - h_real
    inv_h = 1.0 / float(h_real)
    mean = jnp.sum(h, axis=-1, keepdims=True) * inv_h
    centered = h - mean
    sumsq = jnp.sum(centered * centered, axis=-1, keepdims=True)
    if pad_extra:
        # Padded lanes contribute (-mean)^2 each to sumsq; remove them exactly.
        sumsq = sumsq - float(pad_extra) * (mean * mean)
    var = sumsq * inv_h
    h_norm = centered * jax.lax.rsqrt(var + LN_EPS) * g_ref[...] + beta_ref[...]
    # gamma/beta padded lanes are zero -> h_norm padded lanes are zero.

    # ---- ReLU; Dropout(0.2) is identity in eval mode.
    h_act = jnp.maximum(h_norm, 0.0)

    # ---- Linear 2 (0.1 residual scale folded into W2/b2); padded W2 rows are zero.
    y = jnp.dot(h_act.astype(w2_ref.dtype), w2_ref[...],
                preferred_element_type=jnp.float32) + b2_ref[...]

    # ---- Residual: out = x + (0.1 * enhanced), scale pre-folded.
    o_ref[...] = (x_f32 + y).astype(o_ref.dtype)


def prepare_params(w1, b1, gamma, beta, w2, b2, *, mxu_dtype=jnp.float32):
    """One-time parameter prep.

    Pads the hidden dim H to a lane-dense multiple of 128 (zero tails so padded
    lanes stay exactly zero through the whole chain), folds the 0.1 residual
    scale into W2/b2, and casts the matmul weights to `mxu_dtype`.

    w1: [F, H]  b1/gamma/beta: [1, H] (or [H])  w2: [H, F]  b2: [1, F] (or [F]).
    F is left un-padded; the x/out HBM tiles stay at the real feature width.
    """
    F, H = w1.shape
    H_pad = _round_up(H, _LANE)
    w1p = jnp.zeros((F, H_pad), jnp.float32).at[:, :H].set(
        jnp.asarray(w1, jnp.float32)).astype(mxu_dtype)
    w2p = jnp.zeros((H_pad, F), jnp.float32).at[:H, :].set(
        jnp.asarray(w2, jnp.float32) * 0.1).astype(mxu_dtype)
    b1p = jnp.zeros((1, H_pad), jnp.float32).at[:, :H].set(
        jnp.asarray(b1, jnp.float32).reshape(1, H))
    gp = jnp.zeros((1, H_pad), jnp.float32).at[:, :H].set(
        jnp.asarray(gamma, jnp.float32).reshape(1, H))
    bp = jnp.zeros((1, H_pad), jnp.float32).at[:, :H].set(
        jnp.asarray(beta, jnp.float32).reshape(1, H))
    b2p = jnp.asarray(b2, jnp.float32).reshape(1, F) * 0.1
    return (w1p, b1p, gp, bp, w2p, b2p, H)


def feature_enhancement(x, params, *, block_m=None):
    """x: [B, F]; params: output of prepare_params(). Returns [B, F] in x.dtype."""
    w1p, b1p, gp, bp, w2p, b2p, h_real = params
    B, F = x.shape
    F_w, H_pad = w1p.shape
    assert F_w == F, "parameter feature width mismatch"

    if block_m is None:
        # Large tiles (amortize ~0.35us/step), but keep >=2 grid steps when B
        # allows it so the batch axis can shard across v7x's two TensorCores.
        target = 2048
        if B > _SUBLANE:
            block_m = min(target, _round_up(pl.cdiv(B, 2), _SUBLANE))
        else:
            block_m = _SUBLANE
    block_m = max(_SUBLANE, _round_up(block_m, _SUBLANE))
    block_m = min(block_m, _round_up(B, _SUBLANE))
    grid = (pl.cdiv(B, block_m),)   # masked last tile handles the batch remainder

    # VMEM budget: double-buffered x/out tiles + single-copy weights + rough f32
    # intermediates. Request estimate + small headroom (no 64 MiB cap, no floor).
    itemsize = jnp.dtype(x.dtype).itemsize
    w_item = jnp.dtype(w1p.dtype).itemsize
    est = (2 * 2 * block_m * F * itemsize          # x + out tiles, double-buffered
           + 2 * F * H_pad * w_item                # W1 + W2, single resident copy
           + (3 * H_pad + F) * 4                   # biases / LN params
           + 4 * block_m * H_pad * 4)              # f32 intermediates (rough)
    vmem_limit = int(est + (4 << 20))

    cost = pl.CostEstimate(
        flops=int(4 * B * F * H_pad),                          # two matmuls
        transcendentals=int(B),                                # rsqrt per row
        bytes_accessed=int(2 * B * F * itemsize + 2 * F * H_pad * w_item),
    )

    const_spec = pl.BlockSpec(memory_space=pltpu.MemorySpace.VMEM)
    kernel = functools.partial(_feature_enhancement_kernel, h_real=int(h_real))

    out = pl.pallas_call(
        kernel,
        out_shape=jax.ShapeDtypeStruct((B, F), x.dtype),
        grid_spec=pltpu.PrefetchScalarGridSpec(
            num_scalar_prefetch=0,
            grid=grid,
            in_specs=[
                pl.BlockSpec((block_m, F), lambda i: (i, 0)),  # x tile (real F)
                const_spec,  # W1    [F, H_pad]
                const_spec,  # b1    [1, H_pad]
                const_spec,  # gamma [1, H_pad]
                const_spec,  # beta  [1, H_pad]
                const_spec,  # W2    [H_pad, F] (0.1 folded)
                const_spec,  # b2    [1, F]     (0.1 folded)
            ],
            out_specs=pl.BlockSpec((block_m, F), lambda i: (i, 0)),
        ),
        compiler_params=pltpu.CompilerParams(
            dimension_semantics=("parallel",),
            vmem_limit_bytes=vmem_limit),
        cost_estimate=cost,
    )(x, w1p, b1p, gp, bp, w2p, b2p)

    return out


def feature_enhancement_ref(x, w1, b1, gamma, beta, w2, b2):
    """Pure-JAX reference (eval-mode dropout), literal module semantics."""
    xf = x.astype(jnp.float32)
    h = xf @ w1 + b1
    mean = jnp.mean(h, axis=-1, keepdims=True)
    var = jnp.mean((h - mean) ** 2, axis=-1, keepdims=True)
    h = (h - mean) * jax.lax.rsqrt(var + LN_EPS) * gamma + beta
    h = jnp.maximum(h, 0.0)
    y = h @ w2 + b2
    return xf + 0.1 * y


if __name__ == "__main__":
    # Small shapes consistent with the module: batch=8, in_features=32, hidden=64.
    B, F, H = 8, 32, 64

    key = jax.random.PRNGKey(0)
    kx, k1, k2, k3, k4, kx2 = jax.random.split(key, 6)

    x = jax.random.normal(kx, (B, F), dtype=jnp.float32)

    # Deterministic parameter init (roughly Kaiming-uniform like nn.Linear).
    bound1 = 1.0 / (F ** 0.5)
    w1 = jax.random.uniform(k1, (F, H), jnp.float32, -bound1, bound1)
    b1 = jax.random.uniform(k2, (1, H), jnp.float32, -bound1, bound1)
    gamma = jnp.ones((1, H), jnp.float32)   # LayerNorm weight
    beta = jnp.zeros((1, H), jnp.float32)   # LayerNorm bias
    bound2 = 1.0 / (H ** 0.5)
    w2 = jax.random.uniform(k3, (H, F), jnp.float32, -bound2, bound2)
    b2 = jax.random.uniform(k4, (1, F), jnp.float32, -bound2, bound2)

    # --- f32 weights, small batch (single grid step, lane-sparse F kept in HBM) ---
    params_f32 = prepare_params(w1, b1, gamma, beta, w2, b2, mxu_dtype=jnp.float32)
    out = jax.block_until_ready(feature_enhancement(x, params_f32))
    ref = feature_enhancement_ref(x, w1, b1, gamma, beta, w2, b2)
    assert out.shape == (B, F)
    assert jnp.allclose(out, ref, atol=2e-5, rtol=2e-5), "f32 small-batch mismatch"

    # --- f32 weights, larger non-aligned batch -> multi-step grid + masked last tile ---
    B_big = 1000
    x_big = jax.random.normal(kx2, (B_big, F), dtype=jnp.float32)
    ref_big = feature_enhancement_ref(x_big, w1, b1, gamma, beta, w2, b2)

    out_big = jax.block_until_ready(
        feature_enhancement(x_big, params_f32, block_m=256))   # grid=4, remainder tile
    assert out_big.shape == (B_big, F)
    assert jnp.allclose(out_big, ref_big, atol=1e-4, rtol=1e-4), "f32 big-batch mismatch"

    out_big_def = jax.block_until_ready(
        feature_enhancement(x_big, params_f32))                # default block_m, grid>=2
    assert jnp.allclose(out_big_def, ref_big, atol=1e-4, rtol=1e-4), \
        "f32 default-block mismatch"

    # --- bf16 MXU weights, f32 accumulation / LayerNorm / residual ---
    params_bf16 = prepare_params(w1, b1, gamma, beta, w2, b2, mxu_dtype=jnp.bfloat16)
    out_bf16w = jax.block_until_ready(feature_enhancement(x_big, params_bf16))
    assert jnp.allclose(out_bf16w, ref_big, atol=5e-2, rtol=5e-2), "bf16-weight mismatch"

    # --- bf16 I/O (halves the dominant HBM traffic); compute stays f32 in-kernel ---
    x_bf16 = x_big.astype(jnp.bfloat16)
    ref_bf16 = feature_enhancement_ref(x_bf16.astype(jnp.float32),
                                       w1, b1, gamma, beta, w2, b2)
    out_bf16io = jax.block_until_ready(feature_enhancement(x_bf16, params_f32))
    assert out_bf16io.dtype == jnp.bfloat16
    assert jnp.allclose(out_bf16io.astype(jnp.float32), ref_bf16,
                        atol=3e-2, rtol=3e-2), "bf16 I/O mismatch"

    print("KERNEL_OK")
</pallas_src>

<mosaic_0001>
module attributes {stable_mosaic.version = 11 : i64} {
  func.func @_feature_enhancement_kernel(%arg0: i32, %arg1: memref<8x32xf32, #tpu.memory_space<vmem>>, %arg2: memref<32x128xf32, #tpu.memory_space<vmem>>, %arg3: memref<1x128xf32, #tpu.memory_space<vmem>>, %arg4: memref<1x128xf32, #tpu.memory_space<vmem>>, %arg5: memref<1x128xf32, #tpu.memory_space<vmem>>, %arg6: memref<128x32xf32, #tpu.memory_space<vmem>>, %arg7: memref<1x32xf32, #tpu.memory_space<vmem>>, %arg8: memref<8x32xf32, #tpu.memory_space<vmem>>) attributes {dimension_semantics = [#tpu.dimension_semantics<parallel>], iteration_bounds = array<i64: 1>, scalar_prefetch = 0 : i64, scratch_operands = 0 : i64, tpu.core_type = #tpu.core_type<tc>, window_params = [{transform_indices = @transform_0, window_bounds = array<i64: 8, 32>}, {pipeline_mode = #tpu.pipeline_mode<synchronous>, transform_indices = @transform_1, window_bounds = array<i64: 32, 128>}, {pipeline_mode = #tpu.pipeline_mode<synchronous>, transform_indices = @transform_2, window_bounds = array<i64: 1, 128>}, {pipeline_mode = #tpu.pipeline_mode<synchronous>, transform_indices = @transform_3, window_bounds = array<i64: 1, 128>}, {pipeline_mode = #tpu.pipeline_mode<synchronous>, transform_indices = @transform_4, window_bounds = array<i64: 1, 128>}, {pipeline_mode = #tpu.pipeline_mode<synchronous>, transform_indices = @transform_5, window_bounds = array<i64: 128, 32>}, {pipeline_mode = #tpu.pipeline_mode<synchronous>, transform_indices = @transform_6, window_bounds = array<i64: 1, 32>}, {transform_indices = @transform_7, window_bounds = array<i64: 8, 32>}]} {
    %c0 = arith.constant 0 : index
    %c0_0 = arith.constant 0 : index
    %0 = vector.load %arg1[%c0, %c0_0] : memref<8x32xf32, #tpu.memory_space<vmem>>, vector<8x32xf32>
    %c0_1 = arith.constant 0 : index
    %c0_2 = arith.constant 0 : index
    %1 = vector.load %arg2[%c0_1, %c0_2] : memref<32x128xf32, #tpu.memory_space<vmem>>, vector<32x128xf32>
    %cst = arith.constant dense<0.000000e+00> : vector<8x128xf32>
    %2 = tpu.matmul %0, %1, %cst {dimension_numbers = #tpu.dot_dimension_numbers<[1], [0], [0], [1], [0, 0, 1, 1], [], []>} : vector<8x32xf32>, vector<32x128xf32>, vector<8x128xf32> -> vector<8x128xf32>
    %c0_3 = arith.constant 0 : index
    %c0_4 = arith.constant 0 : index
    %3 = vector.load %arg3[%c0_3, %c0_4] : memref<1x128xf32, #tpu.memory_space<vmem>>, vector<1x128xf32>
    %4 = vector.broadcast %3 : vector<1x128xf32> to vector<8x128xf32>
    %5 = arith.addf %2, %4 : vector<8x128xf32>
    %cst_5 = arith.constant dense<0.000000e+00> : vector<8xf32>
    %6 = vector.multi_reduction <add>, %5, %cst_5 [1] : vector<8x128xf32> to vector<8xf32>
    %7 = vector.shape_cast %6 : vector<8xf32> to vector<8x1xf32>
    %cst_6 = arith.constant 1.562500e-02 : f32
    %8 = vector.broadcast %cst_6 : f32 to vector<8x1xf32>
    %9 = arith.mulf %7, %8 : vector<8x1xf32>
    %10 = vector.broadcast %9 : vector<8x1xf32> to vector<8x128xf32>
    %11 = arith.subf %5, %10 : vector<8x128xf32>
    %12 = arith.mulf %11, %11 : vector<8x128xf32>
    %cst_7 = arith.constant dense<0.000000e+00> : vector<8xf32>
    %13 = vector.multi_reduction <add>, %12, %cst_7 [1] : vector<8x128xf32> to vector<8xf32>
    %14 = vector.shape_cast %13 : vector<8xf32> to vector<8x1xf32>
    %15 = arith.mulf %9, %9 : vector<8x1xf32>
    %cst_8 = arith.constant 6.400000e+01 : f32
    %16 = vector.broadcast %cst_8 : f32 to vector<8x1xf32>
    %17 = arith.mulf %16, %15 : vector<8x1xf32>
    %18 = arith.subf %14, %17 : vector<8x1xf32>
    %cst_9 = arith.constant 1.562500e-02 : f32
    %19 = vector.broadcast %cst_9 : f32 to vector<8x1xf32>
    %20 = arith.mulf %18, %19 : vector<8x1xf32>
    %cst_10 = arith.constant 9.99999974E-6 : f32
    %21 = vector.broadcast %cst_10 : f32 to vector<8x1xf32>
    %22 = arith.addf %20, %21 : vector<8x1xf32>
    %23 = math.rsqrt %22 : vector<8x1xf32>
    %24 = vector.broadcast %23 : vector<8x1xf32> to vector<8x128xf32>
    %25 = arith.mulf %11, %24 : vector<8x128xf32>
    %c0_11 = arith.constant 0 : index
    %c0_12 = arith.constant 0 : index
    %26 = vector.load %arg4[%c0_11, %c0_12] : memref<1x128xf32, #tpu.memory_space<vmem>>, vector<1x128xf32>
    %27 = vector.broadcast %26 : vector<1x128xf32> to vector<8x128xf32>
    %28 = arith.mulf %25, %27 : vector<8x128xf32>
    %c0_13 = arith.constant 0 : index
    %c0_14 = arith.constant 0 : index
    %29 = vector.load %arg5[%c0_13, %c0_14] : memref<1x128xf32, #tpu.memory_space<vmem>>, vector<1x128xf32>
    %30 = vector.broadcast %29 : vector<1x128xf32> to vector<8x128xf32>
    %31 = arith.addf %28, %30 : vector<8x128xf32>
    %cst_15 = arith.constant 0.000000e+00 : f32
    %32 = vector.broadcast %cst_15 : f32 to vector<8x128xf32>
    %33 = arith.maximumf %31, %32 : vector<8x128xf32>
    %c0_16 = arith.constant 0 : index
    %c0_17 = arith.constant 0 : index
    %34 = vector.load %arg6[%c0_16, %c0_17] : memref<128x32xf32, #tpu.memory_space<vmem>>, vector<128x32xf32>
    %cst_18 = arith.constant dense<0.000000e+00> : vector<8x32xf32>
    %35 = tpu.matmul %33, %34, %cst_18 {dimension_numbers = #tpu.dot_dimension_numbers<[1], [0], [0], [1], [0, 0, 1, 1], [], []>} : vector<8x128xf32>, vector<128x32xf32>, vector<8x32xf32> -> vector<8x32xf32>
    %c0_19 = arith.constant 0 : index
    %c0_20 = arith.constant 0 : index
    %36 = vector.load %arg7[%c0_19, %c0_20] : memref<1x32xf32, #tpu.memory_space<vmem>>, vector<1x32xf32>
    %37 = vector.broadcast %36 : vector<1x32xf32> to vector<8x32xf32>
    %38 = arith.addf %35, %37 : vector<8x32xf32>
    %39 = arith.addf %0, %38 : vector<8x32xf32>
    %c0_21 = arith.constant 0 : index
    %c0_22 = arith.constant 0 : index
    %40 = vector.load %arg8[%c0_21, %c0_22] : memref<8x32xf32, #tpu.memory_space<vmem>>, vector<8x32xf32>
    tpu.vector_store %arg8[%c0_21, %c0_22], %39 {strides = array<i32>} : memref<8x32xf32, #tpu.memory_space<vmem>>, vector<8x32xf32>,
    return
  }
  func.func @transform_0(%arg0: i32) -> (i32, i32) {
    %c0_i32 = arith.constant 0 : i32
    %c0_i32_0 = arith.constant 0 : i32
    return %arg0, %c0_i32 : i32, i32
  }
  func.func @transform_1(%arg0: i32) -> (i32, i32) {
    %c0_i32 = arith.constant 0 : i32
    %c0_i32_0 = arith.constant 0 : i32
    %c0_i32_1 = arith.constant 0 : i32
    return %c0_i32, %c0_i32_0 : i32, i32
  }
  func.func @transform_2(%arg0: i32) -> (i32, i32) {
    %c0_i32 = arith.constant 0 : i32
    %c0_i32_0 = arith.constant 0 : i32
    %c0_i32_1 = arith.constant 0 : i32
    return %c0_i32, %c0_i32_0 : i32, i32
  }
  func.func @transform_3(%arg0: i32) -> (i32, i32) {
    %c0_i32 = arith.constant 0 : i32
    %c0_i32_0 = arith.constant 0 : i32
    %c0_i32_1 = arith.constant 0 : i32
    return %c0_i32, %c0_i32_0 : i32, i32
  }
  func.func @transform_4(%arg0: i32) -> (i32, i32) {
    %c0_i32 = arith.constant 0 : i32
    %c0_i32_0 = arith.constant 0 : i32
    %c0_i32_1 = arith.constant 0 : i32
    return %c0_i32, %c0_i32_0 : i32, i32
  }
  func.func @transform_5(%arg0: i32) -> (i32, i32) {
    %c0_i32 = arith.constant 0 : i32
    %c0_i32_0 = arith.constant 0 : i32
    %c0_i32_1 = arith.constant 0 : i32
    return %c0_i32, %c0_i32_0 : i32, i32
  }
  func.func @transform_6(%arg0: i32) -> (i32, i32) {
    %c0_i32 = arith.constant 0 : i32
    %c0_i32_0 = arith.constant 0 : i32
    %c0_i32_1 = arith.constant 0 : i32
    return %c0_i32, %c0_i32_0 : i32, i32
  }
  func.func @transform_7(%arg0: i32) -> (i32, i32) {
    %c0_i32 = arith.constant 0 : i32
    %c0_i32_0 = arith.constant 0 : i32
    return %arg0, %c0_i32 : i32, i32
  }
}

</mosaic_0001>

<llo_original>
// kernel: tpu_custom_call.1
$region0: #{tpu_custom_call.1}
  #allocation0 [shape = 'u32[]', space=smem, size = 0x4, offset = 0x4, fixed_abs, tag = 'smem constant byte address 0x4 - core index']
  #allocation1 [shape = 'u32[144,128]{1,0:T(1,128)}', space=vmem, size = 0x12000, scoped, tag = 'internal scratch']
  %s0 = inlined_call_operand.vmem [shape: f32[8,32], index: 0, kind: input, shape index: {}]
  %s1 = inlined_call_operand.vmem [shape: f32[32,128], index: 1, kind: input, shape index: {}]
  %s2 = inlined_call_operand.vmem [shape: f32[1,128], index: 2, kind: input, shape index: {}]
  %s3 = inlined_call_operand.vmem [shape: f32[1,128], index: 3, kind: input, shape index: {}]
  %s4 = inlined_call_operand.vmem [shape: f32[1,128], index: 4, kind: input, shape index: {}]
  %s5 = inlined_call_operand.vmem [shape: f32[128,32], index: 5, kind: input, shape index: {}]
  %s6 = inlined_call_operand.vmem [shape: f32[1,32], index: 6, kind: input, shape index: {}]
  %s7 = inlined_call_operand.hbm [shape: f32[8,32], index: 7, kind: output, shape index: {}]
  %s8 = sld [smem:[#allocation0]]
  $region38: #{tpu_custom_call.1} parent=0
    _
  %s10 = ssub.s32 1, %s8
  %s11 = scalar_select 0, %s10, %s8
  $region1: #{tpu_custom_call.1} parent=0
    #allocation2 [shape = 'u8[4096]{0}', space=vmem, size = 0x1000, scoped, tag = 'output window, operand 0, single buffered']
    #allocation3 [shape = 's32[1]{0}', space=sflag, size = 0x4, scoped, tag = 'scoped memory for tpu_custom_call.1']
    %12 = vsyncpa [#allocation3], 0
    // Predicated region
    $region2: #{tpu_custom_call.1} parent=1 // pred_check
      _
    $region3: #{tpu_custom_call.1} parent=1 // pred_check_branch
      %14 = sbr.rel (0) target = $region5
    $region4: #{tpu_custom_call.1} parent=1 // pred_region
      _
    $region5: #{tpu_custom_call.1} parent=1 // pred_fallthru
      _
    // Predicated region
    $region6: #{tpu_custom_call.1} parent=1 // pred_check
      _
    $region7: #{tpu_custom_call.1} parent=1 // pred_check_branch
      %16 = sbr.rel (0) target = $region9
    $region8: #{tpu_custom_call.1} parent=1 // pred_region
      _
    $region9: #{tpu_custom_call.1} parent=1 // pred_fallthru
      _
    // Predicated region
    $region10: #{tpu_custom_call.1} parent=1 // pred_check
      _
    $region11: #{tpu_custom_call.1} parent=1 // pred_check_branch
      %18 = sbr.rel (0) target = $region13
    $region12: #{tpu_custom_call.1} parent=1 // pred_region
      _
    $region13: #{tpu_custom_call.1} parent=1 // pred_fallthru
      _
    // Predicated region
    $region14: #{tpu_custom_call.1} parent=1 // pred_check
      _
    $region15: #{tpu_custom_call.1} parent=1 // pred_check_branch
      %20 = sbr.rel (0) target = $region17
    $region16: #{tpu_custom_call.1} parent=1 // pred_region
      _
    $region17: #{tpu_custom_call.1} parent=1 // pred_fallthru
      _
    // Predicated region
    $region18: #{tpu_custom_call.1} parent=1 // pred_check
      _
    $region19: #{tpu_custom_call.1} parent=1 // pred_check_branch
      %22 = sbr.rel (0) target = $region21
    $region20: #{tpu_custom_call.1} parent=1 // pred_region
      _
    $region21: #{tpu_custom_call.1} parent=1 // pred_fallthru
      _
    // Predicated region
    $region22: #{tpu_custom_call.1} parent=1 // pred_check
      _
    $region23: #{tpu_custom_call.1} parent=1 // pred_check_branch
      %24 = sbr.rel (0) target = $region25
    $region24: #{tpu_custom_call.1} parent=1 // pred_region
      _
    $region25: #{tpu_custom_call.1} parent=1 // pred_fallthru
      _
    // Predicated region
    $region26: #{tpu_custom_call.1} parent=1 // pred_check
      _
    $region27: #{tpu_custom_call.1} parent=1 // pred_check_branch
      %26 = sbr.rel (0) target = $region29
    $region28: #{tpu_custom_call.1} parent=1 // pred_region
      _
    $region29: #{tpu_custom_call.1} parent=1 // pred_fallthru
      _
    %v27 = vld [vmem:[%s0] sm:$0xff]
    %v28 = vld [vmem:[%s1] sm:$0xff]
    %v29 = vld [vmem:[%s1 + $0x8] sm:$0xff]
    %v30 = vld [vmem:[%s1 + $0x10] sm:$0xff]
    %v31 = vld [vmem:[%s1 + $0x18] sm:$0xff]
    %v32 = vld [vmem:[%s2] sm:$0x1]
    %v34 = vlaneseq
    %v35 = vshrl.u32 %v34, 7
    %v36 = vsub.s32 0, %v35
    %v37 = vrot.slane %v32, %v36
    %vm39 = vcmask 261120
    %v41 = vsel %vm39, %v27, 0
    %43 = vmatprep.subr.mxu0 0.0
    %44 = vmatpush1.msra.mxu0 %v28
    %45 = vmatprep.subr.mxu0 0.0
    %46 = vmatpush1.msra.mxu0 %v29
    %47 = vmatprep.subr.mxu0 0.0
    %48 = vmatpush1.msra.mxu0 %v30
    %49 = vmatprep.subr.mxu0 0.0
    %50 = vmatpush1.msra.mxu0 %v31
    %51 = vmatprep.subr.mxu0 0.0
    %52 = vmatpush1.msra.mxu0 0.0
    %53 = vmatprep.subr.mxu0 0.0
    %54 = vmatpush1.msra.mxu0 0.0
    %55 = vmatprep.subr.mxu0 0.0
    %56 = vmatpush1.msra.mxu0 0.0
    %57 = vmatprep.subr.mxu0 0.0
    %58 = vmatpush1.msra.mxu0 0.0
    %59 = vmatprep.subr.mxu0 0.0
    %60 = vmatpush1.msra.mxu0 0.0
    %61 = vmatprep.subr.mxu0 0.0
    %62 = vmatpush1.msra.mxu0 0.0
    %63 = vmatprep.subr.mxu0 0.0
    %64 = vmatpush1.msra.mxu0 0.0
    %65 = vmatprep.subr.mxu0 0.0
    %66 = vmatpush1.msra.mxu0 0.0
    %67 = vmatprep.subr.mxu0 0.0
    %68 = vmatpush1.msra.mxu0 0.0
    %69 = vmatprep.subr.mxu0 0.0
    %70 = vmatpush1.msra.mxu0 0.0
    %71 = vmatprep.subr.mxu0 0.0
    %72 = vmatpush1.msra.mxu0 0.0
    %73 = vmatprep.subr.mxu0 0.0
    %74 = vmatpush1.msra.mxu0 0.0
    %75 = vmatprep.subr.mxu0 0.0
    %76 = vmatpush1.msra.mxu0 0.0
    %77 = vmatprep.subr.mxu0 0.0
    %78 = vmatpush1.msra.mxu0 0.0
    %79 = vmatprep.subr.mxu0 0.0
    %80 = vmatpush1.msra.mxu0 0.0
    %81 = vmatprep.subr.mxu0 0.0
    %82 = vmatpush1.msra.mxu0 0.0
    %83 = vmatprep.subr.mxu0 0.0
    %84 = vmatpush1.msra.mxu0 0.0
    %85 = vmatprep.subr.mxu0 0.0
    %86 = vmatpush1.msra.mxu0 0.0
    %87 = vmatprep.subr.mxu0 0.0
    %88 = vmatpush1.msra.mxu0 0.0
    %89 = vmatprep.subr.mxu0 0.0
    %90 = vmatpush1.msra.mxu0 0.0
    %91 = vmatprep.subr.mxu0 0.0
    %92 = vmatpush1.msra.mxu0 0.0
    %93 = vmatprep.subr.mxu0 0.0
    %94 = vmatpush1.msra.mxu0 0.0
    %95 = vmatprep.subr.mxu0 0.0
    %96 = vmatpush1.msra.mxu0 0.0
    %97 = vmatprep.subr.mxu0 0.0
    %98 = vmatpush1.msra.mxu0 0.0
    %99 = vmatprep.subr.mxu0 0.0
    %100 = vmatpush1.msra.mxu0 0.0
    %101 = vmatprep.subr.mxu0 0.0
    %102 = vmatpush1.msra.mxu0 0.0
    %103 = vmatprep.subr.mxu0 0.0
    %104 = vmatpush1.msra.mxu0 0.0
    %105 = vmatprep.subr.mxu0 0.0
    %106 = vmatpush1.msra.mxu0 0.0
    %107 = vmatprep.mubr.f32.mxu0 0.0
    %108 = vmatmul.mubr.f32.gmra.mrb[0].mxu0 %v41
    %v109 = vpop.f32.mrb[0].mxu0
    %v110 = vadd.f32 %v37, %v109
    %v111 = vpop.f32.mrb[0].mxu0
    %112 = vdwg.mxu0
    %113 = vadd.xlane.f32.xlu0 %v110
    %v114 = vpop.xlane.xlu0 %113
    %v115 = vmul.f32 %v114, 0.015625
    %v116 = vsub.f32 %v110, %v115
    %v117 = vmul.f32 %v116, %v116
    %118 = vadd.xlane.f32.xlu0 %v117
    %v119 = vpop.xlane.xlu0 %118
    %v120 = vmul.f32 %v115, %v115
    %v121 = vmul.f32 %v120, 64.0
    %v122 = vsub.f32 %v119, %v121
    %v123 = vmul.f32 %v122, 0.015625
    %v124 = vadd.f32 %v123, 1e-05
    %v125 = vrsqrt.pop %v124
    %v126 = vmul.f32 %v116, %v125
    %v127 = vld [vmem:[%s3] sm:$0x1]
    %v129 = vlaneseq
    %v130 = vshrl.u32 %v129, 7
    %v131 = vsub.s32 0, %v130
    %v132 = vrot.slane %v127, %v131
    %v134 = vmul.f32 %v126, %v132
    %v135 = vld [vmem:[%s4] sm:$0x1]
    %v137 = vlaneseq
    %v138 = vshrl.u32 %v137, 7
    %v139 = vsub.s32 0, %v138
    %v140 = vrot.slane %v135, %v139
    %v142 = vadd.f32 %v134, %v140
    %v143 = vmax.f32 %v142, 0.0
    %v144 = vld [vmem:[%s5] sm:$0xff]
    %v145 = vld [vmem:[%s5 + $0x8] sm:$0xff]
    %v146 = vld [vmem:[%s5 + $0x10] sm:$0xff]
    %v147 = vld [vmem:[%s5 + $0x18] sm:$0xff]
    %v148 = vld [vmem:[%s5 + $0x20] sm:$0xff]
    %v149 = vld [vmem:[%s5 + $0x28] sm:$0xff]
    %v150 = vld [vmem:[%s5 + $0x30] sm:$0xff]
    %v151 = vld [vmem:[%s5 + $0x38] sm:$0xff]
    %v152 = vld [vmem:[%s5 + $0x40] sm:$0xff]
    %v153 = vld [vmem:[%s5 + $0x48] sm:$0xff]
    %v154 = vld [vmem:[%s5 + $0x50] sm:$0xff]
    %v155 = vld [vmem:[%s5 + $0x58] sm:$0xff]
    %v156 = vld [vmem:[%s5 + $0x60] sm:$0xff]
    %v157 = vld [vmem:[%s5 + $0x68] sm:$0xff]
    %v158 = vld [vmem:[%s5 + $0x70] sm:$0xff]
    %v159 = vld [vmem:[%s5 + $0x78] sm:$0xff]
    %v160 = vld [vmem:[%s6] sm:$0x1]
    %v162 = vlaneseq
    %v163 = vshrl.u32 %v162, 7
    %v164 = vsub.s32 0, %v163
    %v165 = vrot.slane %v160, %v164
    %167 = vmatprep.subr.mxu0 0.0
    %168 = vmatpush1.msra.mxu0 %v144
    %169 = vmatprep.subr.mxu0 0.0
    %170 = vmatpush1.msra.mxu0 %v145
    %171 = vmatprep.subr.mxu0 0.0
    %172 = vmatpush1.msra.mxu0 %v146
    %173 = vmatprep.subr.mxu0 0.0
    %174 = vmatpush1.msra.mxu0 %v147
    %175 = vmatprep.subr.mxu0 0.0
    %176 = vmatpush1.msra.mxu0 %v148
    %177 = vmatprep.subr.mxu0 0.0
    %178 = vmatpush1.msra.mxu0 %v149
    %179 = vmatprep.subr.mxu0 0.0
    %180 = vmatpush1.msra.mxu0 %v150
    %181 = vmatprep.subr.mxu0 0.0
    %182 = vmatpush1.msra.mxu0 %v151
    %183 = vmatprep.subr.mxu0 0.0
    %184 = vmatpush1.msra.mxu0 %v152
    %185 = vmatprep.subr.mxu0 0.0
    %186 = vmatpush1.msra.mxu0 %v153
    %187 = vmatprep.subr.mxu0 0.0
    %188 = vmatpush1.msra.mxu0 %v154
    %189 = vmatprep.subr.mxu0 0.0
    %190 = vmatpush1.msra.mxu0 %v155
    %191 = vmatprep.subr.mxu0 0.0
    %192 = vmatpush1.msra.mxu0 %v156
    %193 = vmatprep.subr.mxu0 0.0
    %194 = vmatpush1.msra.mxu0 %v157
    %195 = vmatprep.subr.mxu0 0.0
    %196 = vmatpush1.msra.mxu0 %v158
    %197 = vmatprep.subr.mxu0 0.0
    %198 = vmatpush1.msra.mxu0 %v159
    %199 = vmatprep.subr.mxu0 0.0
    %200 = vmatpush1.msra.mxu0 0.0
    %201 = vmatprep.subr.mxu0 0.0
    %202 = vmatpush1.msra.mxu0 0.0
    %203 = vmatprep.subr.mxu0 0.0
    %204 = vmatpush1.msra.mxu0 0.0
    %205 = vmatprep.subr.mxu0 0.0
    %206 = vmatpush1.msra.mxu0 0.0
    %207 = vmatprep.subr.mxu0 0.0
    %208 = vmatpush1.msra.mxu0 0.0
    %209 = vmatprep.subr.mxu0 0.0
    %210 = vmatpush1.msra.mxu0 0.0
    %211 = vmatprep.subr.mxu0 0.0
    %212 = vmatpush1.msra.mxu0 0.0
    %213 = vmatprep.subr.mxu0 0.0
    %214 = vmatpush1.msra.mxu0 0.0
    %215 = vmatprep.subr.mxu0 0.0
    %216 = vmatpush1.msra.mxu0 0.0
    %217 = vmatprep.subr.mxu0 0.0
    %218 = vmatpush1.msra.mxu0 0.0
    %219 = vmatprep.subr.mxu0 0.0
    %220 = vmatpush1.msra.mxu0 0.0
    %221 = vmatprep.subr.mxu0 0.0
    %222 = vmatpush1.msra.mxu0 0.0
    %223 = vmatprep.subr.mxu0 0.0
    %224 = vmatpush1.msra.mxu0 0.0
    %225 = vmatprep.subr.mxu0 0.0
    %226 = vmatpush1.msra.mxu0 0.0
    %227 = vmatprep.subr.mxu0 0.0
    %228 = vmatpush1.msra.mxu0 0.0
    %229 = vmatprep.subr.mxu0 0.0
    %230 = vmatpush1.msra.mxu0 0.0
    %231 = vmatprep.mubr.f32.mxu0 0.0
    %232 = vmatmul.mubr.f32.gmra.mrb[0].mxu0 %v143
    %v233 = vpop.f32.mrb[0].mxu0
    %v234 = vadd.f32 %v165, %v233
    %v235 = vpop.f32.mrb[0].mxu0
    %236 = vdwg.mxu0
    %v237 = vadd.f32 %v27, %v234
    %238 = vst.msk [vmem:[#allocation2] sm:$0xff] %vm39, %v237
    // Predicated region
    $region30: #{tpu_custom_call.1} parent=1 // pred_check
      _
    $region31: #{tpu_custom_call.1} parent=1 // pred_check_branch
      %240 = sbr.rel (0) target = $region33
    $region32: #{tpu_custom_call.1} parent=1 // pred_region
      %s242 = ssub.s32 128, 128
      %243 = vsyncadd [#allocation3], %s242
      %s245 = sshll.u32 [#allocation2], 4
      %s246 = int_to_ptr.vmem [resolvable:$true] %s245
      %248 = dma.vmem_to_hbm [thread:$0]  %s246, 128, %s7, [#allocation3]
    $region33: #{tpu_custom_call.1} parent=1 // pred_fallthru
      _
    // Predicated region
    $region34: #{tpu_custom_call.1} parent=1 // pred_check
      _
    $region35: #{tpu_custom_call.1} parent=1 // pred_check_branch
      %250 = sbr.rel (0) target = $region37
    $region36: #{tpu_custom_call.1} parent=1 // pred_region
      %251 = dma.done [#allocation3], 128
    $region37: #{tpu_custom_call.1} parent=1 // pred_fallthru
      _
    %252 = vsyncpa [#allocation3], 1

</llo_original>
